<compile_context>
chip_gen: v5e
topology: v5e:2x2
jax: 0.10.0
libtpu: 0.0.40
codegen_flags: <defaults>
</compile_context>

<pallas_src>
import functools
import math

import jax
import jax.numpy as jnp
from jax.experimental import pallas as pl
from jax.experimental.pallas import tpu as pltpu


# ----------------------------- helpers ------------------------------------

def _layer_norm(x, gamma, beta, eps=1e-6):
    # Single-pass LayerNorm: compute E[x] and E[x^2] together,
    # var = E[x^2] - mean^2 (matches nn.LayerNorm(d_model, eps=1e-06)).
    mean = jnp.mean(x, axis=-1, keepdims=True)
    mean2 = jnp.mean(x * x, axis=-1, keepdims=True)
    var = mean2 - mean * mean
    return (x - mean) * jax.lax.rsqrt(var + eps) * gamma + beta


def _const_spec(shape):
    # Constant-index operand (weight / bias / table): fetched once for the whole
    # grid, so single-buffer it instead of the default double buffering.
    nd = len(shape)
    return pl.BlockSpec(tuple(shape), lambda *_: (0,) * nd,
                        pipeline_mode=pl.Buffered(1))


@functools.lru_cache(maxsize=1)
def _vmem_limit_bytes():
    # ~75% of physical VMEM, capped at 96 MiB:
    #   v5e/v6e (128 MiB) -> 96 MiB; v7x (64 MiB) -> 48 MiB.
    try:
        cap = pltpu.get_tpu_info().vmem_capacity_bytes
        return int(min(cap * 3 // 4, 96 * 1024 * 1024))
    except Exception:
        return 48 * 1024 * 1024


def _cparams(n_parallel_axes):
    return pltpu.CompilerParams(
        dimension_semantics=("parallel",) * n_parallel_axes,
        vmem_limit_bytes=_vmem_limit_bytes())


def _q_tile(length):
    # Query-tile rows: 128 when the sequence divides evenly, else the whole
    # (short) sequence.  Bounds the (H, tq, Lk) f32 score tensor in VMEM.
    return 128 if length % 128 == 0 else length


# ----------------------------- in-kernel building blocks -------------------

def _attention(xq, xkv, kmask, wq, bq, wkv, bkv, wo, bo, g, be,
               *, n_head, d_k, d_v, causal, q_offset):
    """Post-LN multi-head attention sub-layer, head-batched on the MXU.

    xq:   (Tq, D) f32 query tile      xkv: (Lk, D) bf16/f32 full K/V stream
    kmask:(1, Lk) f32                 1.0 = attend / 0.0 = masked (key padding)
    wq:   (D, H*dk) bf16              wkv: (D, H*dk + H*dv) bf16
    wo:   (H*dv, D) bf16              biases / LN params f32
    q_offset: global row offset of this query tile (for the causal mask).
    """
    tq = xq.shape[0]
    lk = xkv.shape[0]
    hdk = n_head * d_k
    hdv = n_head * d_v

    xq16 = xq.astype(jnp.bfloat16)
    xkv16 = xkv.astype(jnp.bfloat16)

    q = jnp.dot(xq16, wq, preferred_element_type=jnp.float32) + bq
    kv = jnp.dot(xkv16, wkv, preferred_element_type=jnp.float32) + bkv
    # NOTE: this split is lane-aligned whenever H*dk % 128 == 0 (true for the
    # standard 512/8/64 config); for the tiny demo config it costs a small copy.
    k = kv[:, :hdk]
    v = kv[:, hdk:]

    # TODO(synk): with d_k < 128 these head reshapes cross (8,128) vreg tiles and
    # imply XLU relayouts; a 128-aligned head layout would remove them.
    qh = q.reshape(tq, n_head, d_k)
    kh = k.reshape(lk, n_head, d_k)
    vh = v.reshape(lk, n_head, d_v)

    scale = 1.0 / math.sqrt(d_k)
    s = jnp.einsum('qhd,khd->hqk',
                   qh.astype(jnp.bfloat16), kh.astype(jnp.bfloat16),
                   preferred_element_type=jnp.float32) * scale   # (H, Tq, Lk)

    allow = kmask > 0.0                                          # (1, Lk)
    if causal:
        row = q_offset + jax.lax.broadcasted_iota(jnp.int32, (tq, lk), 0)
        col = jax.lax.broadcasted_iota(jnp.int32, (tq, lk), 1)
        allow = allow & (row >= col)                             # (Tq, Lk)
    s = jnp.where(allow, s, -1e9)                                # masked_fill

    s = s - jnp.max(s, axis=-1, keepdims=True)
    p = jnp.exp(s)
    p = p * pl.reciprocal(jnp.sum(p, axis=-1, keepdims=True), approx=True)

    oh = jnp.einsum('hqk,khd->qhd',
                    p.astype(jnp.bfloat16), vh.astype(jnp.bfloat16),
                    preferred_element_type=jnp.float32)          # (Tq, H, dv)
    o = oh.reshape(tq, hdv)
    o = jnp.dot(o.astype(jnp.bfloat16), wo,
                preferred_element_type=jnp.float32) + bo
    o = o + xq                                                   # residual
    return _layer_norm(o, g, be)


def _ffn(x, w1, b1, w2, b2, g, be):
    # Post-LN position-wise FFN: LayerNorm(W2 relu(W1 x + b1) + b2 + residual)
    h = jnp.dot(x.astype(jnp.bfloat16), w1,
                preferred_element_type=jnp.float32) + b1
    h = jnp.maximum(h, 0.0)
    y = jnp.dot(h.astype(jnp.bfloat16), w2,
                preferred_element_type=jnp.float32) + b2
    return _layer_norm(y + x, g, be)


# ----------------------------- Pallas kernels ------------------------------

def emb_pos_ln_kernel(emb_ref, pos_ref, g_ref, b_ref, out_ref):
    # (word_emb + positional_encoding) -> LayerNorm   (dropout == identity)
    x = emb_ref[0].astype(jnp.float32) + pos_ref[...]
    out_ref[0] = _layer_norm(x, g_ref[...], b_ref[...]).astype(out_ref.dtype)


def enc_layer_kernel(xq_ref, xkv_ref, kmask_ref,
                     wq_ref, bq_ref, wkv_ref, bkv_ref, wo_ref, bo_ref,
                     ag_ref, ab_ref,
                     w1_ref, b1_ref, w2_ref, b2_ref, fg_ref, fb_ref,
                     out_ref, *, n_head, d_k, d_v, tq):
    # Fused encoder layer: self-attention + FFN (one HBM round-trip), tiled
    # over the query rows (grid axis 1).
    q_off = pl.program_id(1) * tq
    xq = xq_ref[0].astype(jnp.float32)
    xkv = xkv_ref[0]
    kmask = kmask_ref[0]
    y = _attention(xq, xkv, kmask,
                   wq_ref[...], bq_ref[...], wkv_ref[...], bkv_ref[...],
                   wo_ref[...], bo_ref[...], ag_ref[...], ab_ref[...],
                   n_head=n_head, d_k=d_k, d_v=d_v, causal=False, q_offset=q_off)
    y = _ffn(y, w1_ref[...], b1_ref[...], w2_ref[...], b2_ref[...],
             fg_ref[...], fb_ref[...])
    out_ref[0] = y.astype(out_ref.dtype)


def dec_layer_kernel(xq_ref, xkv_ref, enc_ref, tmask_ref, smask_ref,
                     s_wq_ref, s_bq_ref, s_wkv_ref, s_bkv_ref, s_wo_ref, s_bo_ref,
                     s_g_ref, s_b_ref,
                     c_wq_ref, c_bq_ref, c_wkv_ref, c_bkv_ref, c_wo_ref, c_bo_ref,
                     c_g_ref, c_b_ref,
                     w1_ref, b1_ref, w2_ref, b2_ref, fg_ref, fb_ref,
                     out_ref, *, n_head, d_k, d_v, tq):
    # Fused decoder layer: causal self-attn + cross-attn + FFN, query-tiled.
    q_off = pl.program_id(1) * tq
    xq = xq_ref[0].astype(jnp.float32)
    xkv = xkv_ref[0]
    enc = enc_ref[0]
    tmask = tmask_ref[0]
    smask = smask_ref[0]
    y = _attention(xq, xkv, tmask,
                   s_wq_ref[...], s_bq_ref[...], s_wkv_ref[...], s_bkv_ref[...],
                   s_wo_ref[...], s_bo_ref[...], s_g_ref[...], s_b_ref[...],
                   n_head=n_head, d_k=d_k, d_v=d_v, causal=True, q_offset=q_off)
    z = _attention(y, enc, smask,
                   c_wq_ref[...], c_bq_ref[...], c_wkv_ref[...], c_bkv_ref[...],
                   c_wo_ref[...], c_bo_ref[...], c_g_ref[...], c_b_ref[...],
                   n_head=n_head, d_k=d_k, d_v=d_v, causal=False, q_offset=q_off)
    z = _ffn(z, w1_ref[...], b1_ref[...], w2_ref[...], b2_ref[...],
             fg_ref[...], fb_ref[...])
    out_ref[0] = z.astype(out_ref.dtype)


def proj_kernel(x_ref, w_ref, out_ref):
    # target_word_projection (bias=False, weight shared with the embedding):
    # standard ((1,),(0,)) contraction against a pre-transposed (D, tile_v)
    # weight tile -> no per-step transpose/relayout of the weight.
    out_ref[0] = jnp.dot(x_ref[0], w_ref[...],
                         preferred_element_type=jnp.float32)


# ----------------------------- kernel wrappers -----------------------------

def emb_pos_ln(emb, pos, gamma, beta):
    B, L, D = emb.shape
    return pl.pallas_call(
        emb_pos_ln_kernel,
        out_shape=jax.ShapeDtypeStruct((B, L, D), jnp.bfloat16),
        grid=(B,),
        in_specs=[pl.BlockSpec((1, L, D), lambda b: (b, 0, 0)),
                  _const_spec(pos.shape), _const_spec(gamma.shape),
                  _const_spec(beta.shape)],
        out_specs=pl.BlockSpec((1, L, D), lambda b: (b, 0, 0)),
        compiler_params=_cparams(1),
    )(emb, pos, gamma, beta)


def encoder_layer(x, kmask, layer, n_head, d_k, d_v):
    B, L, D = x.shape
    tq = _q_tile(L)
    nq = L // tq
    a, f = layer["attn"], layer["ffn"]
    args = (x, x, kmask,
            a["wq"], a["bq"], a["wkv"], a["bkv"], a["wo"], a["bo"],
            a["ln_g"], a["ln_b"],
            f["w1"], f["b1"], f["w2"], f["b2"], f["ln_g"], f["ln_b"])
    in_specs = ([pl.BlockSpec((1, tq, D), lambda b, q: (b, q, 0)),   # query tile
                 pl.BlockSpec((1, L, D), lambda b, q: (b, 0, 0)),    # full K/V stream
                 pl.BlockSpec((1, 1, L), lambda b, q: (b, 0, 0))]    # key pad mask
                + [_const_spec(t.shape) for t in args[3:]])
    return pl.pallas_call(
        functools.partial(enc_layer_kernel, n_head=n_head, d_k=d_k, d_v=d_v, tq=tq),
        out_shape=jax.ShapeDtypeStruct((B, L, D), jnp.bfloat16),
        grid=(B, nq),
        in_specs=in_specs,
        out_specs=pl.BlockSpec((1, tq, D), lambda b, q: (b, q, 0)),
        compiler_params=_cparams(2),
    )(*args)


def decoder_layer(x, enc, tmask, smask, layer, n_head, d_k, d_v):
    B, Lt, D = x.shape
    Ls = enc.shape[1]
    tq = _q_tile(Lt)
    nq = Lt // tq
    sa, ca, f = layer["self_attn"], layer["cross_attn"], layer["ffn"]
    args = (x, x, enc, tmask, smask,
            sa["wq"], sa["bq"], sa["wkv"], sa["bkv"], sa["wo"], sa["bo"],
            sa["ln_g"], sa["ln_b"],
            ca["wq"], ca["bq"], ca["wkv"], ca["bkv"], ca["wo"], ca["bo"],
            ca["ln_g"], ca["ln_b"],
            f["w1"], f["b1"], f["w2"], f["b2"], f["ln_g"], f["ln_b"])
    in_specs = ([pl.BlockSpec((1, tq, D), lambda b, q: (b, q, 0)),   # query tile
                 pl.BlockSpec((1, Lt, D), lambda b, q: (b, 0, 0)),   # full self K/V
                 pl.BlockSpec((1, Ls, D), lambda b, q: (b, 0, 0)),   # full enc K/V
                 pl.BlockSpec((1, 1, Lt), lambda b, q: (b, 0, 0)),   # tgt pad mask
                 pl.BlockSpec((1, 1, Ls), lambda b, q: (b, 0, 0))]   # src pad mask
                + [_const_spec(t.shape) for t in args[5:]])
    return pl.pallas_call(
        functools.partial(dec_layer_kernel, n_head=n_head, d_k=d_k, d_v=d_v, tq=tq),
        out_shape=jax.ShapeDtypeStruct((B, Lt, D), jnp.bfloat16),
        grid=(B, nq),
        in_specs=in_specs,
        out_specs=pl.BlockSpec((1, tq, D), lambda b, q: (b, q, 0)),
        compiler_params=_cparams(2),
    )(*args)


def project(x, proj_w, n_vocab):
    # logits = x @ emb_w.T, computed against a pre-transposed, 128-padded
    # (D, Vp) bf16 weight copy, tiled over the vocab so large vocabularies
    # never need the full weight (or a (1, L, Vp) output tile) in VMEM.
    B, L, D = x.shape
    Vp = proj_w.shape[1]
    tile_v = 512 if Vp % 512 == 0 else (256 if Vp % 256 == 0 else 128)
    nv = Vp // tile_v
    logits = pl.pallas_call(
        proj_kernel,
        out_shape=jax.ShapeDtypeStruct((B, L, Vp), jnp.float32),
        grid=(B, nv),
        in_specs=[pl.BlockSpec((1, L, D), lambda b, v: (b, 0, 0)),
                  pl.BlockSpec((D, tile_v), lambda b, v: (0, v))],
        out_specs=pl.BlockSpec((1, L, tile_v), lambda b, v: (b, 0, v)),
        compiler_params=_cparams(2),
    )(x, proj_w)
    return logits[..., :n_vocab]


# ----------------------------- parameters ---------------------------------

def xavier(key, shape):
    fan_in, fan_out = shape
    lim = math.sqrt(6.0 / (fan_in + fan_out))
    return jax.random.uniform(key, shape, jnp.float32, -lim, lim)


def sinusoid_table(n_position, d_hid):
    pos = jnp.arange(n_position, dtype=jnp.float32)[:, None]
    i = jnp.arange(d_hid)
    div = jnp.power(10000.0, (2 * (i // 2)).astype(jnp.float32) / d_hid)
    ang = pos / div
    return jnp.where(i % 2 == 0, jnp.sin(ang), jnp.cos(ang)).astype(jnp.float32)


def init_attn(key, d_model, n_head, d_k, d_v):
    ks = jax.random.split(key, 4)
    wq = xavier(ks[0], (d_model, n_head * d_k))
    wk = xavier(ks[1], (d_model, n_head * d_k))
    wv = xavier(ks[2], (d_model, n_head * d_v))
    return dict(
        # Q weight kept separate; K|V fused into one wide matmul.
        wq=wq.astype(jnp.bfloat16),
        bq=jnp.zeros((1, n_head * d_k), jnp.float32),
        wkv=jnp.concatenate([wk, wv], axis=1).astype(jnp.bfloat16),
        bkv=jnp.zeros((1, n_head * (d_k + d_v)), jnp.float32),
        wo=xavier(ks[3], (n_head * d_v, d_model)).astype(jnp.bfloat16),
        bo=jnp.zeros((1, d_model), jnp.float32),
        ln_g=jnp.ones((1, d_model), jnp.float32),
        ln_b=jnp.zeros((1, d_model), jnp.float32),
    )


def init_ffn(key, d_model, d_inner):
    k1, k2 = jax.random.split(key)
    return dict(
        w1=xavier(k1, (d_model, d_inner)).astype(jnp.bfloat16),
        b1=jnp.zeros((1, d_inner), jnp.float32),
        w2=xavier(k2, (d_inner, d_model)).astype(jnp.bfloat16),
        b2=jnp.zeros((1, d_model), jnp.float32),
        ln_g=jnp.ones((1, d_model), jnp.float32),
        ln_b=jnp.zeros((1, d_model), jnp.float32),
    )


def init_params(key, cfg):
    V, D, DI = cfg["n_vocab"], cfg["d_model"], cfg["d_inner"]
    H, dk, dv = cfg["n_head"], cfg["d_k"], cfg["d_v"]
    kiter = iter(jax.random.split(key, 64))
    # emb shared: src emb == tgt emb == projection weight
    # (both *_weight_sharing True; reference xavier-inits it after Embedding).
    emb = xavier(next(kiter), (V, D))
    Vp = ((V + 127) // 128) * 128
    proj_w = jnp.zeros((D, Vp), jnp.float32).at[:, :V].set(emb.T)
    return dict(
        emb=emb.astype(jnp.bfloat16),                      # (V, D) gather table
        proj_w=proj_w.astype(jnp.bfloat16),                # (D, Vp) shared, transposed
        pos_table=sinusoid_table(cfg["n_position"], D),
        enc_ln_g=jnp.ones((1, D), jnp.float32), enc_ln_b=jnp.zeros((1, D), jnp.float32),
        dec_ln_g=jnp.ones((1, D), jnp.float32), dec_ln_b=jnp.zeros((1, D), jnp.float32),
        enc_layers=[dict(attn=init_attn(next(kiter), D, H, dk, dv),
                         ffn=init_ffn(next(kiter), D, DI))
                    for _ in range(cfg["n_layers"])],
        dec_layers=[dict(self_attn=init_attn(next(kiter), D, H, dk, dv),
                         cross_attn=init_attn(next(kiter), D, H, dk, dv),
                         ffn=init_ffn(next(kiter), D, DI))
                    for _ in range(cfg["n_layers"])],
    )


# ----------------------------- forward pass --------------------------------

def transformer_forward(params, src_ids, tgt_ids, cfg):
    B, Ls = src_ids.shape
    _, Lt = tgt_ids.shape
    H, dk, dv = cfg["n_head"], cfg["d_k"], cfg["d_v"]

    # Key-padding masks only ((B, 1, Lk) floats, 1.0 = attend); the causal
    # part is built in-kernel with broadcasted_iota — no L^2 masks in HBM.
    src_kmask = (src_ids != cfg["src_pad"]).astype(jnp.float32)[:, None, :]
    tgt_kmask = (tgt_ids != cfg["tgt_pad"]).astype(jnp.float32)[:, None, :]

    emb_w = params["emb"]
    pos_table = params["pos_table"]

    # ---- Encoder ----
    # TODO(synk): embedding gather kept in plain JAX glue (data-dependent gather).
    src_emb = jnp.take(emb_w, src_ids, axis=0)                    # (B, Ls, D) bf16
    enc = emb_pos_ln(src_emb, pos_table[:Ls], params["enc_ln_g"], params["enc_ln_b"])
    for layer in params["enc_layers"]:
        enc = encoder_layer(enc, src_kmask, layer, H, dk, dv)

    # ---- Decoder ----
    # TODO(synk): reference Transformer.forward swaps decoder args/masks (and has
    # attribute typos), making it non-runnable as written; implementing the
    # documented intended semantics (causal+pad self-mask, src pad mask for cross).
    tgt_emb = jnp.take(emb_w, tgt_ids, axis=0)                    # (B, Lt, D) bf16
    dec = emb_pos_ln(tgt_emb, pos_table[:Lt], params["dec_ln_g"], params["dec_ln_b"])
    for layer in params["dec_layers"]:
        dec = decoder_layer(dec, enc, tgt_kmask, src_kmask, layer, H, dk, dv)

    # Final projection; weight shared with the embedding (Linear, bias=False).
    logits = project(dec, params["proj_w"], cfg["n_vocab"])       # (B, Lt, V)
    # scale_emb_or_prj == 'none' -> no d_model**-0.5 scaling.
    return logits.reshape(-1, logits.shape[-1])                   # (B*Lt, V)


# ----------------------------- main ----------------------------------------

if __name__ == "__main__":
    cfg = dict(n_vocab=32, d_model=32, d_inner=64, n_layers=2, n_head=4,
               d_k=8, d_v=8, src_pad=0, tgt_pad=0, n_position=200)
    key = jax.random.PRNGKey(0)
    k_param, k_src, k_tgt = jax.random.split(key, 3)
    params = init_params(k_param, cfg)

    B, Ls, Lt = 2, 8, 8
    src = jax.random.randint(k_src, (B, Ls), 1, cfg["n_vocab"], dtype=jnp.int32)
    tgt = jax.random.randint(k_tgt, (B, Lt), 1, cfg["n_vocab"], dtype=jnp.int32)
    # add some padding tokens so the pad masks are exercised
    src = src.at[:, -2:].set(cfg["src_pad"])
    tgt = tgt.at[:, -1:].set(cfg["tgt_pad"])

    out = transformer_forward(params, src, tgt, cfg)
    out = jax.block_until_ready(out)
    assert out.shape == (B * Lt, cfg["n_vocab"]), out.shape
    assert bool(jnp.all(jnp.isfinite(out)))
    print("KERNEL_OK")
</pallas_src>

<mosaic_0001>
module attributes {stable_mosaic.version = 11 : i64} {
  func.func @emb_pos_ln_kernel(%arg0: i32, %arg1: memref<1x8x32xbf16, #tpu.memory_space<vmem>>, %arg2: memref<8x32xf32, #tpu.memory_space<vmem>>, %arg3: memref<1x32xf32, #tpu.memory_space<vmem>>, %arg4: memref<1x32xf32, #tpu.memory_space<vmem>>, %arg5: memref<1x8x32xbf16, #tpu.memory_space<vmem>>) attributes {dimension_semantics = [#tpu.dimension_semantics<parallel>], iteration_bounds = array<i64: 2>, scalar_prefetch = 0 : i64, scratch_operands = 0 : i64, tpu.core_type = #tpu.core_type<tc>, window_params = [{transform_indices = @transform_0, window_bounds = array<i64: 1, 8, 32>}, {pipeline_mode = #tpu.pipeline_mode<synchronous>, transform_indices = @transform_1, window_bounds = array<i64: 8, 32>}, {pipeline_mode = #tpu.pipeline_mode<synchronous>, transform_indices = @transform_2, window_bounds = array<i64: 1, 32>}, {pipeline_mode = #tpu.pipeline_mode<synchronous>, transform_indices = @transform_3, window_bounds = array<i64: 1, 32>}, {transform_indices = @transform_4, window_bounds = array<i64: 1, 8, 32>}]} {
    %c0 = arith.constant 0 : index
    %c0_0 = arith.constant 0 : index
    %c0_1 = arith.constant 0 : index
    %0 = vector.load %arg1[%c0, %c0_0, %c0_1] : memref<1x8x32xbf16, #tpu.memory_space<vmem>>, vector<1x8x32xbf16>
    %1 = vector.shape_cast %0 : vector<1x8x32xbf16> to vector<8x32xbf16>
    %2 = arith.extf %1 : vector<8x32xbf16> to vector<8x32xf32>
    %c0_2 = arith.constant 0 : index
    %c0_3 = arith.constant 0 : index
    %3 = vector.load %arg2[%c0_2, %c0_3] : memref<8x32xf32, #tpu.memory_space<vmem>>, vector<8x32xf32>
    %4 = arith.addf %2, %3 : vector<8x32xf32>
    %c0_4 = arith.constant 0 : index
    %c0_5 = arith.constant 0 : index
    %5 = vector.load %arg3[%c0_4, %c0_5] : memref<1x32xf32, #tpu.memory_space<vmem>>, vector<1x32xf32>
    %c0_6 = arith.constant 0 : index
    %c0_7 = arith.constant 0 : index
    %6 = vector.load %arg4[%c0_6, %c0_7] : memref<1x32xf32, #tpu.memory_space<vmem>>, vector<1x32xf32>
    %cst = arith.constant dense<0.000000e+00> : vector<8xf32>
    %7 = vector.multi_reduction <add>, %4, %cst [1] : vector<8x32xf32> to vector<8xf32>
    %8 = vector.shape_cast %7 : vector<8xf32> to vector<8x1xf32>
    %cst_8 = arith.constant 3.200000e+01 : f32
    %9 = vector.broadcast %cst_8 : f32 to vector<8x1xf32>
    %10 = arith.divf %8, %9 : vector<8x1xf32>
    %11 = arith.mulf %4, %4 : vector<8x32xf32>
    %cst_9 = arith.constant dense<0.000000e+00> : vector<8xf32>
    %12 = vector.multi_reduction <add>, %11, %cst_9 [1] : vector<8x32xf32> to vector<8xf32>
    %13 = vector.shape_cast %12 : vector<8xf32> to vector<8x1xf32>
    %cst_10 = arith.constant 3.200000e+01 : f32
    %14 = vector.broadcast %cst_10 : f32 to vector<8x1xf32>
    %15 = arith.divf %13, %14 : vector<8x1xf32>
    %16 = arith.mulf %10, %10 : vector<8x1xf32>
    %17 = arith.subf %15, %16 : vector<8x1xf32>
    %18 = vector.broadcast %10 : vector<8x1xf32> to vector<8x32xf32>
    %19 = arith.subf %4, %18 : vector<8x32xf32>
    %cst_11 = arith.constant 9.99999997E-7 : f32
    %20 = vector.broadcast %cst_11 : f32 to vector<8x1xf32>
    %21 = arith.addf %17, %20 : vector<8x1xf32>
    %22 = math.rsqrt %21 : vector<8x1xf32>
    %23 = vector.broadcast %22 : vector<8x1xf32> to vector<8x32xf32>
    %24 = arith.mulf %19, %23 : vector<8x32xf32>
    %25 = vector.broadcast %5 : vector<1x32xf32> to vector<8x32xf32>
    %26 = arith.mulf %24, %25 : vector<8x32xf32>
    %27 = vector.broadcast %6 : vector<1x32xf32> to vector<8x32xf32>
    %28 = arith.addf %26, %27 : vector<8x32xf32>
    %29 = arith.truncf %28 : vector<8x32xf32> to vector<8x32xbf16>
    %c0_12 = arith.constant 0 : index
    %c0_13 = arith.constant 0 : index
    %c0_14 = arith.constant 0 : index
    %30 = vector.load %arg5[%c0_12, %c0_13, %c0_14] : memref<1x8x32xbf16, #tpu.memory_space<vmem>>, vector<1x8x32xbf16>
    %31 = vector.shape_cast %30 : vector<1x8x32xbf16> to vector<8x32xbf16>
    %32 = vector.shape_cast %29 : vector<8x32xbf16> to vector<1x8x32xbf16>
    tpu.vector_store %arg5[%c0_12, %c0_13, %c0_14], %32 {strides = array<i32>} : memref<1x8x32xbf16, #tpu.memory_space<vmem>>, vector<1x8x32xbf16>,
    return
  }
  func.func @transform_0(%arg0: i32) -> (i32, i32, i32) {
    %c0_i32 = arith.constant 0 : i32
    %c0_i32_0 = arith.constant 0 : i32
    %c0_i32_1 = arith.constant 0 : i32
    return %arg0, %c0_i32, %c0_i32_0 : i32, i32, i32
  }
  func.func @transform_1(%arg0: i32) -> (i32, i32) {
    %c0_i32 = arith.constant 0 : i32
    %c0_i32_0 = arith.constant 0 : i32
    %c0_i32_1 = arith.constant 0 : i32
    return %c0_i32, %c0_i32_0 : i32, i32
  }
  func.func @transform_2(%arg0: i32) -> (i32, i32) {
    %c0_i32 = arith.constant 0 : i32
    %c0_i32_0 = arith.constant 0 : i32
    %c0_i32_1 = arith.constant 0 : i32
    return %c0_i32, %c0_i32_0 : i32, i32
  }
  func.func @transform_3(%arg0: i32) -> (i32, i32) {
    %c0_i32 = arith.constant 0 : i32
    %c0_i32_0 = arith.constant 0 : i32
    %c0_i32_1 = arith.constant 0 : i32
    return %c0_i32, %c0_i32_0 : i32, i32
  }
  func.func @transform_4(%arg0: i32) -> (i32, i32, i32) {
    %c0_i32 = arith.constant 0 : i32
    %c0_i32_0 = arith.constant 0 : i32
    %c0_i32_1 = arith.constant 0 : i32
    return %arg0, %c0_i32, %c0_i32_0 : i32, i32, i32
  }
}

</mosaic_0001>

<llo_original>
// kernel: tpu_custom_call.1
$region0: #{tpu_custom_call.1}
  #allocation0 [shape = 'u32[]', space=smem, size = 0x4, offset = 0x4, fixed_abs, tag = 'smem constant byte address 0x4 - core index']
  #allocation1 [shape = 'u32[72,128]{1,0:T(1,128)}', space=vmem, size = 0x9000, scoped, tag = 'internal scratch']
  %s0 = inlined_call_operand.hbm [shape: bf16[2,8,32], index: 0, kind: input, shape index: {}]
  %s1 = inlined_call_operand.hbm [shape: f32[8,32], index: 1, kind: input, shape index: {}]
  %s2 = inlined_call_operand.vmem [shape: f32[1,32], index: 2, kind: input, shape index: {}]
  %s3 = inlined_call_operand.vmem [shape: f32[1,32], index: 3, kind: input, shape index: {}]
  %s4 = inlined_call_operand.hbm [shape: bf16[2,8,32], index: 4, kind: output, shape index: {}]
  %s5 = sld [smem:[#allocation0]]
  $region57: #{tpu_custom_call.1} parent=0
    _
  %s7 = ssub.s32 1, %s5
  %s8 = scalar_select 0, %s7, %s5
  $region1: #{tpu_custom_call.1} parent=0
    #allocation2 [shape = 'u8[4096]{0}', space=vmem, size = 0x1000, scoped, tag = 'input window, operand 0']
    #allocation3 [shape = 's32[2]{0}', space=sflag, size = 0x8, scoped, tag = 'scoped memory for tpu_custom_call.1']
    #allocation4 [shape = 's32[2]{0}', space=sflag, size = 0x8, scoped, tag = 'scoped memory for tpu_custom_call.1']
    #allocation5 [shape = 'u8[4096]{0}', space=vmem, size = 0x1000, scoped, tag = 'input window, operand 1, single buffered']
    #allocation6 [shape = 's32[1]{0}', space=sflag, size = 0x4, scoped, tag = 'scoped memory for tpu_custom_call.1']
    #allocation7 [shape = 'u8[4096]{0}', space=vmem, size = 0x1000, scoped, tag = 'output window, operand 0']
    %9 = vsyncpa [#allocation3], 0
    %s10 = scalar_lea.sflag [#allocation3], 1
    %11 = vsyncpa %s10, 0
    %12 = vsyncpa [#allocation6], 0
    %13 = vsyncpa [#allocation4], 0
    %s14 = scalar_lea.sflag [#allocation4], 1
    %15 = vsyncpa %s14, 0
    loop: start=0, step=1, limit=4
    $region2: #{tpu_custom_call.1} parent=1 // loop_pre_header
      _
    $region3: #{tpu_custom_call.1} parent=1 // loop_header
      %s17 = sphi 0, %s21
      %p18 = scmp.ge.s32.totalorder %s17, 4
      %s27 = sphi 0, %s29
      %s30 = sphi 0, %s27
      %s31 = sphi 0, %s30
      %s47 = sphi 0, %s31
      %s51 = sphi 0, %s51
      %s53 = sphi 0, %s51
      %s54 = sphi 0, %s53
      %s68 = sphi 0, %s54
      %s72 = sphi 0, %s72
      %s74 = sphi 0, %s72
      %s75 = sphi 0, %s74
      %s89 = sphi 0, %s75
      %s93 = sphi 0, %s93
      %s95 = sphi 0, %s93
      %s96 = sphi 0, %s95
      %s110 = sphi 0, %s96
      %s116 = sphi 0, %s118
      %s119 = sphi 0, %s116
      %s120 = sphi 0, %s119
      %s136 = sphi 0, %s120
    $region4: #{tpu_custom_call.1} parent=1 // loop_header_branch
      %20 = sbr.rel (%p18) target = $region8
    $region5: #{tpu_custom_call.1} parent=1 // loop_body
      %s22 = ssub.s32 %s17, 1
      %s23 = ssub.s32 %s17, 2
      %s24 = sadd.s32 %s17, 1
      %s25 = ssub.s32 %s17, %s24
      %p26 = scmp.eq.s32.totalorder %s25, 0
      %s28 = sadd.s32 %s27, 1
      %s29 = scalar_select %p26, %s27, %s28
      %p32 = pneg %p26
      %p33 = scmp.eq.s32.totalorder %s17, 1
      %p34 = por %p32, %p33
      %p35 = scmp.ne.s32.totalorder %s27, %s30
      %p36 = scmp.eq.s32.totalorder %s17, 0
      %p37 = por %p35, %p36
      %p38 = scmp.ne.s32.totalorder %s27, %s30
      %p39 = scmp.eq.s32.totalorder %s22, 1
      %p40 = por %p38, %p39
      %p41 = scmp.ne.s32.totalorder %s30, %s31
      %p42 = scmp.eq.s32.totalorder %s22, 0
      %p43 = por %p41, %p42
      %p44 = scmp.ne.s32.totalorder %s30, %s31
      %p45 = scmp.eq.s32.totalorder %s23, 1
      %p46 = por %p44, %p45
      %p48 = scmp.ne.s32.totalorder %s31, %s47
      %p49 = scmp.eq.s32.totalorder %s23, 0
      %p50 = por %p48, %p49
      %s52 = sadd.s32 %s51, 1
      %p55 = scmp.eq.s32.totalorder %s17, 1
      %p56 = scmp.ne.s32.totalorder %s51, %s53
      %p57 = scmp.eq.s32.totalorder %s17, 0
      %p58 = por %p56, %p57
      %p59 = scmp.ne.s32.totalorder %s51, %s53
      %p60 = scmp.eq.s32.totalorder %s22, 1
      %p61 = por %p59, %p60
      %p62 = scmp.ne.s32.totalorder %s53, %s54
      %p63 = scmp.eq.s32.totalorder %s22, 0
      %p64 = por %p62, %p63
      %p65 = scmp.ne.s32.totalorder %s53, %s54
      %p66 = scmp.eq.s32.totalorder %s23, 1
      %p67 = por %p65, %p66
      %p69 = scmp.ne.s32.totalorder %s54, %s68
      %p70 = scmp.eq.s32.totalorder %s23, 0
      %p71 = por %p69, %p70
      %s73 = sadd.s32 %s72, 1
      %p76 = scmp.eq.s32.totalorder %s17, 1
      %p77 = scmp.ne.s32.totalorder %s72, %s74
      %p78 = scmp.eq.s32.totalorder %s17, 0
      %p79 = por %p77, %p78
      %p80 = scmp.ne.s32.totalorder %s72, %s74
      %p81 = scmp.eq.s32.totalorder %s22, 1
      %p82 = por %p80, %p81
      %p83 = scmp.ne.s32.totalorder %s74, %s75
      %p84 = scmp.eq.s32.totalorder %s22, 0
      %p85 = por %p83, %p84
      %p86 = scmp.ne.s32.totalorder %s74, %s75
      %p87 = scmp.eq.s32.totalorder %s23, 1
      %p88 = por %p86, %p87
      %p90 = scmp.ne.s32.totalorder %s75, %s89
      %p91 = scmp.eq.s32.totalorder %s23, 0
      %p92 = por %p90, %p91
      %s94 = sadd.s32 %s93, 1
      %p97 = scmp.eq.s32.totalorder %s17, 1
      %p98 = scmp.ne.s32.totalorder %s93, %s95
      %p99 = scmp.eq.s32.totalorder %s17, 0
      %p100 = por %p98, %p99
      %p101 = scmp.ne.s32.totalorder %s93, %s95
      %p102 = scmp.eq.s32.totalorder %s22, 1
      %p103 = por %p101, %p102
      %p104 = scmp.ne.s32.totalorder %s95, %s96
      %p105 = scmp.eq.s32.totalorder %s22, 0
      %p106 = por %p104, %p105
      %p107 = scmp.ne.s32.totalorder %s95, %s96
      %p108 = scmp.eq.s32.totalorder %s23, 1
      %p109 = por %p107, %p108
      %p111 = scmp.ne.s32.totalorder %s96, %s110
      %p112 = scmp.eq.s32.totalorder %s23, 0
      %p113 = por %p111, %p112
      %s114 = ssub.s32 %s17, %s24
      %p115 = scmp.eq.s32.totalorder %s114, 0
      %s117 = sadd.s32 %s116, 1
      %s118 = scalar_select %p115, %s116, %s117
      %p121 = pneg %p115
      %p122 = scmp.eq.s32.totalorder %s17, 1
      %p123 = por %p121, %p122
      %p124 = scmp.ne.s32.totalorder %s116, %s119
      %p125 = scmp.eq.s32.totalorder %s17, 0
      %p126 = por %p124, %p125
      %p127 = scmp.ne.s32.totalorder %s116, %s119
      %p128 = scmp.eq.s32.totalorder %s22, 1
      %p129 = por %p127, %p128
      %p130 = scmp.ne.s32.totalorder %s119, %s120
      %p131 = scmp.eq.s32.totalorder %s22, 0
      %p132 = por %p130, %p131
      %p133 = scmp.ne.s32.totalorder %s119, %s120
      %p134 = scmp.eq.s32.totalorder %s23, 1
      %p135 = por %p133, %p134
      %p137 = scmp.ne.s32.totalorder %s120, %s136
      %p138 = scmp.eq.s32.totalorder %s23, 0
      %p139 = por %p137, %p138
      %p140 = scmp.le.s32.totalorder 1, %s17
      %p141 = scmp.lt.s32.totalorder %s17, 3
      %p142 = pnand %p140, %p141
      %p143 = pneg %p142
      // Predicated region
      $region9: #{tpu_custom_call.1} parent=5 // pred_check
        _
      $region10: #{tpu_custom_call.1} parent=5 // pred_check_branch
        %145 = sbr.rel (%p142) target = $region12
      $region11: #{tpu_custom_call.1} parent=5 // pred_region
        %s146 = ssub.s32 %s17, 1
        // Predicated region
        $region13: #{tpu_custom_call.1} parent=11 // pred_check
          %p147 = pneg %p64
        $region14: #{tpu_custom_call.1} parent=11 // pred_check_branch
          %149 = sbr.rel (%p147) target = $region16
        $region15: #{tpu_custom_call.1} parent=11 // pred_region
          %151 = vsyncadd [#allocation6], 0
          %s153 = sshll.u32 %s1, 4
          %s154 = int_to_ptr.hbm [resolvable:$true] %s153
          %s155 = sshll.u32 [#allocation5], 4
          %s156 = int_to_ptr.vmem [resolvable:$true] %s155
          %158 = dma.hbm_to_vmem [thread:$0]  %s154, 128, %s156, [#allocation6]
        $region16: #{tpu_custom_call.1} parent=11 // pred_fallthru
          _
        // Predicated region
        $region17: #{tpu_custom_call.1} parent=11 // pred_check
          %p159 = pneg %p85
        $region18: #{tpu_custom_call.1} parent=11 // pred_check_branch
          %161 = sbr.rel (%p159) target = $region20
        $region19: #{tpu_custom_call.1} parent=11 // pred_region
          _
        $region20: #{tpu_custom_call.1} parent=11 // pred_fallthru
          _
        // Predicated region
        $region21: #{tpu_custom_call.1} parent=11 // pred_check
          %p162 = pneg %p106
        $region22: #{tpu_custom_call.1} parent=11 // pred_check_branch
          %164 = sbr.rel (%p162) target = $region24
        $region23: #{tpu_custom_call.1} parent=11 // pred_region
          _
        $region24: #{tpu_custom_call.1} parent=11 // pred_fallthru
          _
      $region12: #{tpu_custom_call.1} parent=5 // pred_fallthru
        _
      %p165 = scmp.lt.s32.totalorder %s17, 2
      // Predicated region
      $region25: #{tpu_custom_call.1} parent=5 // pred_check
        %p166 = pneg %p165
      $region26: #{tpu_custom_call.1} parent=5 // pred_check_branch
        %168 = sbr.rel (%p166) target = $region28
      $region27: #{tpu_custom_call.1} parent=5 // pred_region
        // Predicated region
        $region29: #{tpu_custom_call.1} parent=27 // pred_check
          %p169 = pneg %p37
        $region30: #{tpu_custom_call.1} parent=27 // pred_check_branch
          %171 = sbr.rel (%p169) target = $region32
        $region31: #{tpu_custom_call.1} parent=27 // pred_region
          %s172 = sand.u32 %s27, 1
          %s173 = scalar_lea.sflag [#allocation3], %s172
          %s174 = sand.u32 %s27, 1
          %s175 = smul.addr %s174, 4
          %s176 = scalar_lea.vmem [#allocation2], %s175
          %178 = vsyncadd %s173, 0
          %s179 = smul.addr %s17, 4
          %s180 = scalar_lea.hbm %s0, %s179
          %s182 = sshll.u32 %s180, 4
          %s183 = int_to_ptr.hbm [resolvable:$true] %s182
          %s184 = sshll.u32 %s176, 4
          %s185 = int_to_ptr.vmem [resolvable:$true] %s184
          %187 = dma.hbm_to_vmem [thread:$0]  %s183, 64, %s185, %s173
        $region32: #{tpu_custom_call.1} parent=27 // pred_fallthru
          _
      $region28: #{tpu_custom_call.1} parent=5 // pred_fallthru
        _
      %p188 = scmp.le.s32.totalorder 1, %s17
      %p189 = scmp.lt.s32.totalorder %s17, 3
      %p190 = pnand %p188, %p189
      %p191 = pneg %p190
      // Predicated region
      $region33: #{tpu_custom_call.1} parent=5 // pred_check
        _
      $region34: #{tpu_custom_call.1} parent=5 // pred_check_branch
        %193 = sbr.rel (%p190) target = $region36
      $region35: #{tpu_custom_call.1} parent=5 // pred_region
        %s194 = ssub.s32 %s17, 1
        %s195 = sand.u32 %s30, 1
        %s196 = scalar_lea.sflag [#allocation3], %s195
        %s197 = sand.u32 %s30, 1
        %s198 = smul.addr %s197, 4
        %s199 = scalar_lea.vmem [#allocation2], %s198
        // Predicated region
        $region37: #{tpu_custom_call.1} parent=35 // pred_check
          %p200 = pneg %p43
        $region38: #{tpu_custom_call.1} parent=35 // pred_check_branch
          %202 = sbr.rel (%p200) target = $region40
        $region39: #{tpu_custom_call.1} parent=35 // pred_region
          %204 = dma.done %s196, 64
        $region40: #{tpu_custom_call.1} parent=35 // pred_fallthru
          _
        // Predicated region
        $region41: #{tpu_custom_call.1} parent=35 // pred_check
          %p205 = pneg %p64
        $region42: #{tpu_custom_call.1} parent=35 // pred_check_branch
          %207 = sbr.rel (%p205) target = $region44
        $region43: #{tpu_custom_call.1} parent=35 // pred_region
          %209 = dma.done [#allocation6], 128
        $region44: #{tpu_custom_call.1} parent=35 // pred_fallthru
          _
        %s210 = sand.u32 %s30, 1
        %s211 = scalar_lea.sflag [#allocation3], %s210
        %s212 = sand.u32 %s30, 1
        %s213 = smul.addr %s212, 4
        %s214 = scalar_lea.vmem [#allocation2], %s213
        %p215 = pneg %p43
        %p216 = pneg %p40
        %p217 = pneg %p64
        %p218 = pneg %p61
        %p219 = pneg %p85
        %p220 = pneg %p82
        %p221 = pneg %p106
        %p222 = pneg %p103
        %p223 = pneg %p132
        %p224 = pneg %p129
        %s225 = sand.u32 %s119, 1
        %s226 = scalar_lea.sflag [#allocation4], %s225
        %s227 = sand.u32 %s119, 1
        %s228 = smul.addr %s227, 4
        %s229 = scalar_lea.vmem [#allocation7], %s228
        %v230 = vld [vmem:[%s199] sm:$0xf]
        %v231 = vunpack.c.l.bf16 %v230
        %v232 = vld [vmem:[#allocation5] sm:$0xff]
        %v233 = vadd.f32 %v231, %v232
        %v234 = vld [vmem:[%s2] sm:$0x1]
        %v235 = vld [vmem:[%s3] sm:$0x1]
        %vm236 = vcmask 261120
        %v237 = vsel %vm236, %v233, 0.0
        %238 = vadd.xlane.f32.xlu0 %v237
        %v239 = vpop.xlane.xlu0 %238
        %v240 = vrcp.pop 32.0
        %v241 = vmul.f32 32.0, %v240
        %v242 = vsub.f32 1.0, %v241
        %v243 = vmul.f32 %v240, %v242
        %v244 = vadd.f32 %v240, %v243
        %vm245 = vweird.f32 %v240
        %v246 = vsel %vm245, %v240, %v244
        %v247 = vmul.f32 %v239, %v246
        %v248 = vmul.f32 %v233, %v233
        %v249 = vsel %vm236, %v248, 0.0
        %250 = vadd.xlane.f32.xlu0 %v249
        %v251 = vpop.xlane.xlu0 %250
        %v252 = vmul.f32 %v251, %v246
        %v253 = vmul.f32 %v247, %v247
        %v254 = vsub.f32 %v252, %v253
        %v255 = vsub.f32 %v233, %v247
        %v256 = vadd.f32 %v254, 1e-06
        %v257 = vrsqrt.pop %v256
        %v258 = vmul.f32 %v257, %v256
        %v259 = vmul.f32 %v258, %v257
        %v260 = vmul.f32 0.5, %v259
        %v261 = vsub.f32 1.5, %v260
        %v262 = vmul.f32 %v257, %v261
        %vm263 = vweird.f32 %v256
        %vm264 = vweird.f32 %v257
        %vm265 = vmor %vm263, %vm264
        %v266 = vsel %vm265, %v257, %v262
        %v267 = vmul.f32 %v255, %v266
        %v269 = vperm.slane %v234, 0
        %v271 = vmul.f32 %v267, %v269
        %v273 = vperm.slane %v235, 0
        %v275 = vadd.f32 %v271, %v273
        %v276 = vpack.c.bf16 %v275, %v275
        %vm277 = vcmask 257024
        %278 = vst.msk [vmem:[%s229] sm:$0xf] %vm277, %v276
        %s279 = sand.u32 %s119, 1
        %s280 = scalar_lea.sflag [#allocation4], %s279
        %s281 = sand.u32 %s119, 1
        %s282 = smul.addr %s281, 4
        %s283 = scalar_lea.vmem [#allocation7], %s282
        // Predicated region
        $region45: #{tpu_custom_call.1} parent=35 // pred_check
          %p284 = pneg %p129
        $region46: #{tpu_custom_call.1} parent=35 // pred_check_branch
          %286 = sbr.rel (%p284) target = $region48
        $region47: #{tpu_custom_call.1} parent=35 // pred_region
          %288 = vsyncadd %s280, 0
          %s289 = smul.addr %s22, 4
          %s290 = scalar_lea.hbm %s4, %s289
          %s292 = sshll.u32 %s283, 4
          %s293 = int_to_ptr.vmem [resolvable:$true] %s292
          %s294 = sshll.u32 %s290, 4
          %s295 = int_to_ptr.hbm [resolvable:$true] %s294
          %297 = dma.vmem_to_hbm [thread:$0]  %s293, 64, %s295, %s280
        $region48: #{tpu_custom_call.1} parent=35 // pred_fallthru
          _
      $region36: #{tpu_custom_call.1} parent=5 // pred_fallthru
        _
      %p298 = scmp.le.s32.totalorder 2, %s17
      // Predicated region
      $region49: #{tpu_custom_call.1} parent=5 // pred_check
        %p299 = pneg %p298
      $region50: #{tpu_custom_call.1} parent=5 // pred_check_branch
        %301 = sbr.rel (%p299) target = $region52
      $region51: #{tpu_custom_call.1} parent=5 // pred_region
        %s302 = ssub.s32 %s17, 2
        // Predicated region
        $region53: #{tpu_custom_call.1} parent=51 // pred_check
          %p303 = pneg %p135
        $region54: #{tpu_custom_call.1} parent=51 // pred_check_branch
          %305 = sbr.rel (%p303) target = $region56
        $region55: #{tpu_custom_call.1} parent=51 // pred_region
          %s306 = sand.u32 %s120, 1
          %s307 = scalar_lea.sflag [#allocation4], %s306
          %s308 = sand.u32 %s120, 1
          %s309 = smul.addr %s308, 4
          %s310 = scalar_lea.vmem [#allocation7], %s309
          %312 = dma.done %s307, 64
        $region56: #{tpu_custom_call.1} parent=51 // pred_fallthru
          _
      $region52: #{tpu_custom_call.1} parent=5 // pred_fallthru
        _
    $region6: #{tpu_custom_call.1} parent=1 // loop_footer
      %s21 = sadd.s32 1, %s17
    $region7: #{tpu_custom_call.1} parent=1 // loop_footer_branch
      %16 = sbr.rel target = $region3
    $region8: #{tpu_custom_call.1} parent=1 // loop_exit
      _
    %313 = vsyncpa [#allocation3], 1
    %s314 = scalar_lea.sflag [#allocation3], 1
    %315 = vsyncpa %s314, 1
    %316 = vsyncpa [#allocation6], 1
    %317 = vsyncpa [#allocation4], 1
    %s318 = scalar_lea.sflag [#allocation4], 1
    %319 = vsyncpa %s318, 1

</llo_original>
